<compile_context>
chip_gen: v5e
topology: v5e:2x2
jax: 0.10.0
libtpu: 0.0.40
codegen_flags: <defaults>
</compile_context>

<pallas_src>
import jax
import jax.numpy as jnp
from jax.experimental import pallas as pl
from jax.experimental.pallas import tpu as pltpu


def _const_broadcast_kernel(const_ref, out_ref):
    # const_ref: (1, tr, 128)  [or (1, F)]   dense slice of the constant
    # out_ref:   (tb, tr, 128) [or (tb, F)]  same slice replicated over batch
    out_ref[...] = jnp.broadcast_to(const_ref[...], out_ref.shape)


def _vmem_params():
    """(per-output-block byte budget, scoped-VMEM limit) per TPU generation."""
    try:
        cap = pltpu.get_tpu_info().vmem_capacity_bytes
    except Exception:  # query unavailable (e.g. interpret mode): be conservative
        cap = None
    if cap is not None and cap >= 96 * 1024 * 1024:
        # v5e / v6e: 128 MiB physical VMEM -> bigger blocks amortize the
        # ~0.35 us per-grid-step overhead; raise the scoped limit explicitly.
        return 12 * 1024 * 1024, 64 * 1024 * 1024
    # v7x (64 MiB physical) or unknown generation: stay conservative.
    return 4 * 1024 * 1024, 32 * 1024 * 1024


def _largest_divisor_at_most(n, cap):
    cap = max(1, min(n, cap))
    for d in range(cap, 0, -1):
        if n % d == 0:
            return d
    return 1


def _pick_row_tile(rows, max_rows):
    """Divisor of `rows` that keeps (8,128) store tiles dense:
    either a multiple of 8 or the full extent."""
    if rows <= max_rows:
        return rows
    for d in range(min(rows - 1, max_rows), 0, -1):
        if rows % d == 0 and d % 8 == 0:
            return d
    # Nothing dense fits the budget: take the largest dense divisor anyway
    # (or full extent) and rely on the raised scoped-VMEM limit.
    for d in range(rows - 1, 0, -1):
        if rows % d == 0 and d % 8 == 0:
            return d
    return rows


def constant_block_forward(const, batch_size):
    """Broadcast `const` of shape (1, C, H, W) to (batch_size, C, H, W)."""
    _, c, h, w = const.shape
    f = c * h * w
    itemsize = jnp.dtype(const.dtype).itemsize
    budget, vmem_limit = _vmem_params()

    if f % 128 == 0:
        # ---- Lane- and sublane-dense 3-D layout: (batch, F//128, 128). ----
        rows = f // 128
        row_bytes = 128 * itemsize
        # Prefer a full feature slab per block and tile the batch to fit VMEM;
        # only shrink the row (sublane) dim if one batch row is too big alone.
        tr = _pick_row_tile(rows, max(1, budget // row_bytes))
        tb = _largest_divisor_at_most(
            batch_size, max(1, budget // (tr * row_bytes)))

        nb, nr = batch_size // tb, rows // tr
        out_bytes = batch_size * f * itemsize
        # v7x has 2 TensorCores: make sure a large writeback has >=2 parallel
        # grid steps so both cores get work (measured no-op on v5e/v6e).
        if nb * nr < 2 and out_bytes >= (4 * 1024 * 1024):
            if tb > 1:
                tb = _largest_divisor_at_most(batch_size, tb // 2)
            elif tr % 16 == 0:
                tr //= 2
            nb, nr = batch_size // tb, rows // tr

        const_in = const.reshape(1, rows, 128)      # free layout plumbing
        out_shape = jax.ShapeDtypeStruct((batch_size, rows, 128), const.dtype)
        grid = (nb, nr)
        in_specs = [pl.BlockSpec((1, tr, 128), lambda i, j: (0, j, 0))]
        out_specs = pl.BlockSpec((tb, tr, 128), lambda i, j: (i, j, 0))
        dim_sem = ("parallel", "parallel")
    else:
        # ---- Fallback (F not a multiple of 128): 2-D (batch, F) layout. ----
        # Full-extent feature dim keeps the BlockSpec legal; tile the batch
        # with a sublane-dense (multiple-of-8) tile when one exists.
        tb = batch_size
        max_b = max(1, budget // (f * itemsize))
        if batch_size > max_b:
            cand = _largest_divisor_at_most(batch_size, max_b)
            tb = cand if cand % 8 == 0 else batch_size
        const_in = const.reshape(1, f)
        out_shape = jax.ShapeDtypeStruct((batch_size, f), const.dtype)
        grid = (batch_size // tb,)
        in_specs = [pl.BlockSpec((1, f), lambda i: (0, 0))]
        out_specs = pl.BlockSpec((tb, f), lambda i: (i, 0))
        dim_sem = ("parallel",)

    out = pl.pallas_call(
        _const_broadcast_kernel,
        out_shape=out_shape,
        grid_spec=pltpu.PrefetchScalarGridSpec(
            num_scalar_prefetch=0,
            grid=grid,
            in_specs=in_specs,
            out_specs=out_specs,
        ),
        compiler_params=pltpu.CompilerParams(
            dimension_semantics=dim_sem,
            vmem_limit_bytes=vmem_limit,
        ),
        cost_estimate=pl.CostEstimate(
            flops=0,
            transcendentals=0,
            bytes_accessed=(f + batch_size * f) * itemsize,
        ),
    )(const_in)

    # Free reshape back to NCHW to match the PyTorch module's output layout.
    return out.reshape(batch_size, c, h, w)


class ConstantBlock:
    """JAX/Pallas equivalent of the PyTorch ConstantBlock (forward only)."""

    def __init__(self, channels, size):
        # Deterministic init identical to torch.ones(1, channels, *size).
        # TODO(synk): plain array — no trainable-parameter / gradient
        # plumbing; only the forward-pass semantics are implemented.
        self.const = jnp.ones((1, channels, size[0], size[1]), dtype=jnp.float32)

    def __call__(self, x):
        return constant_block_forward(self.const, x.shape[0])


if __name__ == "__main__":
    key = jax.random.PRNGKey(0)
    batch, channels, h, w = 2, 4, 16, 16

    # Input x: only its batch size matters for the forward pass.
    x = jax.random.normal(key, (batch, channels, h, w), dtype=jnp.float32)

    block = ConstantBlock(channels, (h, w))
    out = jax.block_until_ready(block(x))

    # Reference: broadcast of the constant along batch.
    ref = jnp.broadcast_to(block.const, (batch, channels, h, w))
    assert out.shape == (batch, channels, h, w), out.shape
    assert out.dtype == jnp.float32, out.dtype
    assert bool(jnp.all(out == ref)), "mismatch vs reference broadcast"

    print("KERNEL_OK")
</pallas_src>

<mosaic_0001>
module attributes {stable_mosaic.version = 11 : i64} {
  func.func @_const_broadcast_kernel(%arg0: i32, %arg1: i32, %arg2: memref<1x8x128xf32, #tpu.memory_space<vmem>>, %arg3: memref<2x8x128xf32, #tpu.memory_space<vmem>>) attributes {dimension_semantics = [#tpu.dimension_semantics<parallel>, #tpu.dimension_semantics<parallel>], iteration_bounds = array<i64: 1, 1>, scalar_prefetch = 0 : i64, scratch_operands = 0 : i64, tpu.core_type = #tpu.core_type<tc>, window_params = [{transform_indices = @transform_0, window_bounds = array<i64: 1, 8, 128>}, {transform_indices = @transform_1, window_bounds = array<i64: 2, 8, 128>}]} {
    %c0 = arith.constant 0 : index
    %c0_0 = arith.constant 0 : index
    %c0_1 = arith.constant 0 : index
    %0 = vector.load %arg2[%c0, %c0_0, %c0_1] : memref<1x8x128xf32, #tpu.memory_space<vmem>>, vector<1x8x128xf32>
    %1 = vector.shape_cast %0 : vector<1x8x128xf32> to vector<1x8x128xf32>
    %2 = vector.broadcast %1 : vector<1x8x128xf32> to vector<2x8x128xf32>
    %c0_2 = arith.constant 0 : index
    %c0_3 = arith.constant 0 : index
    %c0_4 = arith.constant 0 : index
    %3 = vector.load %arg3[%c0_2, %c0_3, %c0_4] : memref<2x8x128xf32, #tpu.memory_space<vmem>>, vector<2x8x128xf32>
    tpu.vector_store %arg3[%c0_2, %c0_3, %c0_4], %2 {strides = array<i32>} : memref<2x8x128xf32, #tpu.memory_space<vmem>>, vector<2x8x128xf32>,
    return
  }
  func.func @transform_0(%arg0: i32, %arg1: i32) -> (i32, i32, i32) {
    %c0_i32 = arith.constant 0 : i32
    %c0_i32_0 = arith.constant 0 : i32
    %c0_i32_1 = arith.constant 0 : i32
    return %c0_i32, %arg1, %c0_i32_0 : i32, i32, i32
  }
  func.func @transform_1(%arg0: i32, %arg1: i32) -> (i32, i32, i32) {
    %c0_i32 = arith.constant 0 : i32
    %c0_i32_0 = arith.constant 0 : i32
    return %arg0, %arg1, %c0_i32 : i32, i32, i32
  }
}

</mosaic_0001>

<llo_original>
// kernel: tpu_custom_call.1
$region0: #{tpu_custom_call.1}
  #allocation0 [shape = 'u32[]', space=smem, size = 0x4, offset = 0x4, fixed_abs, tag = 'smem constant byte address 0x4 - core index']
  #allocation1 [shape = 'u32[72,128]{1,0:T(1,128)}', space=vmem, size = 0x9000, scoped, tag = 'internal scratch']
  %s0 = inlined_call_operand.hbm [shape: f32[1,8,128], index: 0, kind: input, shape index: {}]
  %s1 = inlined_call_operand.hbm [shape: f32[2,8,128], index: 1, kind: output, shape index: {}]
  %s2 = sld [smem:[#allocation0]]
  $region18: #{tpu_custom_call.1} parent=0
    _
  %s4 = ssub.s32 1, %s2
  %s5 = scalar_select 0, %s4, %s2
  $region1: #{tpu_custom_call.1} parent=0
    #allocation2 [shape = 'u8[4096]{0}', space=vmem, size = 0x1000, scoped, tag = 'input window, operand 0, single buffered']
    #allocation3 [shape = 's32[1]{0}', space=sflag, size = 0x4, scoped, tag = 'scoped memory for tpu_custom_call.1']
    #allocation4 [shape = 's32[1]{0}', space=sflag, size = 0x4, scoped, tag = 'scoped memory for tpu_custom_call.1']
    #allocation5 [shape = 'u8[8192]{0}', space=vmem, size = 0x2000, scoped, tag = 'output window, operand 0, single buffered']
    %6 = vsyncpa [#allocation3], 0
    %7 = vsyncpa [#allocation4], 0
    // Predicated region
    $region2: #{tpu_custom_call.1} parent=1 // pred_check
      _
    $region3: #{tpu_custom_call.1} parent=1 // pred_check_branch
      %9 = sbr.rel (0) target = $region5
    $region4: #{tpu_custom_call.1} parent=1 // pred_region
      %11 = vsyncadd [#allocation3], 0
      %s13 = sshll.u32 %s0, 4
      %s14 = int_to_ptr.hbm [resolvable:$true] %s13
      %s15 = sshll.u32 [#allocation2], 4
      %s16 = int_to_ptr.vmem [resolvable:$true] %s15
      %18 = dma.hbm_to_vmem [thread:$0]  %s14, 128, %s16, [#allocation3]
    $region5: #{tpu_custom_call.1} parent=1 // pred_fallthru
      _
    // Predicated region
    $region6: #{tpu_custom_call.1} parent=1 // pred_check
      _
    $region7: #{tpu_custom_call.1} parent=1 // pred_check_branch
      %20 = sbr.rel (0) target = $region9
    $region8: #{tpu_custom_call.1} parent=1 // pred_region
      %22 = dma.done [#allocation3], 128
    $region9: #{tpu_custom_call.1} parent=1 // pred_fallthru
      _
    %v23 = vld [vmem:[#allocation2] sm:$0xff]
    %24 = vst [vmem:[#allocation5] sm:$0xff] %v23
    %25 = vst [vmem:[#allocation5 + $0x8] sm:$0xff] %v23
    // Predicated region
    $region10: #{tpu_custom_call.1} parent=1 // pred_check
      _
    $region11: #{tpu_custom_call.1} parent=1 // pred_check_branch
      %27 = sbr.rel (0) target = $region13
    $region12: #{tpu_custom_call.1} parent=1 // pred_region
      %29 = vsyncadd [#allocation4], 0
      %s30 = sshll.u32 [#allocation5], 4
      %s31 = int_to_ptr.vmem [resolvable:$true] %s30
      %s32 = sshll.u32 %s1, 4
      %s33 = int_to_ptr.hbm [resolvable:$true] %s32
      %38 = dma.vmem_to_hbm [thread:$0]  %s31, 256, %s33, [#allocation4], 128, 128, 8
    $region13: #{tpu_custom_call.1} parent=1 // pred_fallthru
      _
    // Predicated region
    $region14: #{tpu_custom_call.1} parent=1 // pred_check
      _
    $region15: #{tpu_custom_call.1} parent=1 // pred_check_branch
      %40 = sbr.rel (0) target = $region17
    $region16: #{tpu_custom_call.1} parent=1 // pred_region
      %42 = dma.done [#allocation4], 256
    $region17: #{tpu_custom_call.1} parent=1 // pred_fallthru
      _
    %43 = vsyncpa [#allocation3], 1
    %44 = vsyncpa [#allocation4], 1

</llo_original>
